<compile_context>
chip_gen: v5e
topology: v5e:2x2
jax: 0.10.0
libtpu: 0.0.40
codegen_flags: <defaults>
</compile_context>

<pallas_src>
import math

import jax
import jax.numpy as jnp
from jax.experimental import pallas as pl
from jax.experimental.pallas import tpu as pltpu


def make_fcn_kernel(layer_dims, row_offsets):
    """Fused MLP forward kernel.

    Ref layout:
        x_ref : [tile_b, n_in]   batch-major input block (contiguous HBM rows)
        w_ref : [R, max_in]      packed weights, PyTorch [out, in] layout per layer
        b_ref : [R, 1]           packed biases
        o_ref : [n_out, tile_b]  feature-major, lane-dense output block

    Layer 0:  h[out, b] = sum_j W0[out, j] * x[b, j]   (A @ B^T via dot_general)
    Layer i:  h <- W_i @ h + b_i, tanh on all but the last layer.
    """
    n_linear = len(layer_dims)

    def kernel(x_ref, w_ref, b_ref, o_ref):
        compute_dtype = w_ref.dtype  # f32 by default; bf16 if pre-cast at pack time

        # ---- first layer: no explicit transpose; contraction on both minor dims
        fan_in0, fan_out0 = layer_dims[0]
        w0 = w_ref[0:fan_out0, 0:fan_in0]                     # [out0, in0]
        x = x_ref[...].astype(compute_dtype)                  # [tile_b, in0]
        h = jax.lax.dot_general(
            w0, x,
            dimension_numbers=(((1,), (1,)), ((), ())),       # W0 @ x^T
            preferred_element_type=jnp.float32)               # [out0, tile_b]
        h = h + b_ref[0:fan_out0, :]
        if n_linear > 1:
            h = jnp.tanh(h)

        # ---- remaining layers: canonical feature-major matmuls
        for i in range(1, n_linear):
            fan_in, fan_out = layer_dims[i]
            r0 = row_offsets[i]
            w = w_ref[r0:r0 + fan_out, 0:fan_in]              # [out_i, in_i]
            b = b_ref[r0:r0 + fan_out, :]                     # [out_i, 1]
            h = jnp.dot(w, h.astype(compute_dtype),
                        preferred_element_type=jnp.float32) + b
            if i < n_linear - 1:
                h = jnp.tanh(h)                               # f32 tanh (safe on v5e)

        o_ref[...] = h.astype(o_ref.dtype)

    return kernel


def _default_tile_b(B, n_hidden):
    """Pick a lane-dense batch tile bounded by vreg pressure, preferring >=4 grid steps.

    Two f32 activations of shape [n_hidden, tile_b] are live during
    `dot + bias -> tanh`; keep 2 * n_hidden * tile_b * 4 bytes <= ~128 KiB
    (half the 256 KiB vreg file) so nothing spills.  Prefer >= 4 grid steps so
    the BlockSpec pipeline amortizes the ~0.35 us/step overhead and v7x can
    shard the "parallel" axis across both TensorCores with >= 2 steps each.
    """
    vreg_cap = (128 * 1024) // max(2 * n_hidden * 4, 1)
    vreg_cap = max(128, (vreg_cap // 128) * 128)
    candidates = [c for c in (2048, 1024, 512, 256, 128) if c <= vreg_cap]
    for min_steps in (4, 2, 1):
        for cand in candidates:
            if B % cand == 0 and B // cand >= min_steps:
                return cand
    return B  # tiny / oddly-sized batch: single full-extent tile


def pack_fcn_params(params, use_bf16_weights=False):
    """Pack per-layer (W [out,in], b [out,1]) into two grid-invariant slabs.

    Call once per parameter set (not per forward call).  Weights keep the
    PyTorch [out, in] layout, stacked vertically; columns padded to max_in.
    """
    dims = tuple((int(W.shape[1]), int(W.shape[0])) for W, _ in params)  # (in, out)
    max_in = max(fi for fi, _ in dims)
    row_offsets = []
    r = 0
    for _, fo in dims:
        row_offsets.append(r)
        r += fo
    rows = ((r + 7) // 8) * 8  # pad rows to a sublane multiple

    w_dtype = jnp.bfloat16 if use_bf16_weights else jnp.float32
    w_slab = jnp.zeros((rows, max_in), w_dtype)
    b_slab = jnp.zeros((rows, 1), jnp.float32)
    for (fi, fo), r0, (W, b) in zip(dims, row_offsets, params):
        w_slab = w_slab.at[r0:r0 + fo, 0:fi].set(W.astype(w_dtype))
        b_slab = b_slab.at[r0:r0 + fo, :].set(
            jnp.asarray(b, jnp.float32).reshape(fo, 1))

    return {"w_slab": w_slab, "b_slab": b_slab,
            "dims": dims, "row_offsets": tuple(row_offsets)}


def fcn_forward(x, packed, tile_b=None):
    """Run the fused FCN forward pass as a single Pallas kernel.

    x:      [B, N_INPUT] float32 (same layout as torch.nn.Linear input)
    packed: output of pack_fcn_params(params)
    Returns [B, N_OUTPUT].
    """
    B, n_in = x.shape
    dims = packed["dims"]
    assert dims[0][0] == n_in, "input feature dim mismatch"
    n_out = dims[-1][1]
    n_hidden_max = max(fo for _, fo in dims)

    if tile_b is None:
        tile_b = _default_tile_b(B, n_hidden_max)
    assert B % tile_b == 0, "batch must be divisible by tile_b"
    assert tile_b % 128 == 0 or tile_b == B, (
        "tile_b must be a multiple of 128 (lane width) or equal to the batch")

    w_slab, b_slab = packed["w_slab"], packed["b_slab"]

    # Advisory cost hint so XLA schedules neighbours around the custom call.
    flops = 2 * B * sum(fi * fo for fi, fo in dims)
    transcendentals = B * sum(fo for _, fo in dims[:-1])
    bytes_accessed = (x.size * x.dtype.itemsize
                      + int(w_slab.size) * w_slab.dtype.itemsize
                      + int(b_slab.size) * b_slab.dtype.itemsize
                      + B * n_out * x.dtype.itemsize)

    y_t = pl.pallas_call(
        make_fcn_kernel(dims, packed["row_offsets"]),
        out_shape=jax.ShapeDtypeStruct((n_out, B), x.dtype),
        grid=(B // tile_b,),
        in_specs=[
            pl.BlockSpec((tile_b, n_in), lambda i: (i, 0)),        # batch tiles
            pl.BlockSpec(w_slab.shape, lambda i: (0, 0)),          # resident weights
            pl.BlockSpec(b_slab.shape, lambda i: (0, 0)),          # resident biases
        ],
        out_specs=pl.BlockSpec((n_out, tile_b), lambda i: (0, i)),  # lane-dense
        compiler_params=pltpu.CompilerParams(
            dimension_semantics=("parallel",)),
        cost_estimate=pl.CostEstimate(
            flops=int(flops),
            transcendentals=int(transcendentals),
            bytes_accessed=int(bytes_accessed)),
    )(x, w_slab, b_slab)

    return y_t.T  # [1, B] -> [B, 1]: layout-identical, free


def init_fcn_params(key, n_input, n_output, n_hidden, n_layers):
    """Deterministic Xavier-uniform weights, zero biases (matches FCN.init_weights).

    Weights use PyTorch nn.Linear layout [out_features, in_features];
    biases are [out_features, 1].
    """
    if n_layers < 1:
        raise ValueError("N_LAYERS must be at least 1")
    dims = [n_input] + [n_hidden] * n_layers + [n_output]
    params = []
    for fan_in, fan_out in zip(dims[:-1], dims[1:]):
        key, sub = jax.random.split(key)
        limit = math.sqrt(6.0 / (fan_in + fan_out))
        W = jax.random.uniform(
            sub, (fan_out, fan_in), jnp.float32, minval=-limit, maxval=limit)
        b = jnp.zeros((fan_out, 1), jnp.float32)
        params.append((W, b))
    return params


def fcn_reference(x, params):
    """Pure-JAX reference for correctness check (x: [B, n_in])."""
    h = x
    for i, (W, b) in enumerate(params):
        h = h @ W.T + b.T
        if i < len(params) - 1:
            h = jnp.tanh(h)
    return h


if __name__ == "__main__":
    # PINN-style configuration: inputs (x, t) -> scalar u, hidden width 32.
    N_INPUT, N_OUTPUT, N_HIDDEN, N_LAYERS = 2, 1, 32, 3
    BATCH = 2048  # default tile_b=512 -> grid of 4 "parallel" steps of 512 rows

    key = jax.random.PRNGKey(0)
    key, xk = jax.random.split(key)
    x = jax.random.normal(xk, (BATCH, N_INPUT), jnp.float32)

    params = init_fcn_params(key, N_INPUT, N_OUTPUT, N_HIDDEN, N_LAYERS)
    packed = pack_fcn_params(params)   # one-time packing of grid-invariant slabs

    out = jax.block_until_ready(fcn_forward(x, packed))

    ref = fcn_reference(x, params)
    assert out.shape == (BATCH, N_OUTPUT)
    assert jnp.allclose(out, ref, atol=1e-5, rtol=1e-5), "mismatch vs reference"

    print("KERNEL_OK")
</pallas_src>

<mosaic_0001>
module attributes {stable_mosaic.version = 11 : i64} {
  func.func @kernel(%arg0: i32, %arg1: memref<512x2xf32, #tpu.memory_space<vmem>>, %arg2: memref<104x32xf32, #tpu.memory_space<vmem>>, %arg3: memref<104x1xf32, #tpu.memory_space<vmem>>, %arg4: memref<1x512xf32, #tpu.memory_space<vmem>>) attributes {dimension_semantics = [#tpu.dimension_semantics<parallel>], iteration_bounds = array<i64: 4>, scalar_prefetch = 0 : i64, scratch_operands = 0 : i64, tpu.core_type = #tpu.core_type<tc>, window_params = [{transform_indices = @transform_0, window_bounds = array<i64: 512, 2>}, {pipeline_mode = #tpu.pipeline_mode<synchronous>, transform_indices = @transform_1, window_bounds = array<i64: 104, 32>}, {pipeline_mode = #tpu.pipeline_mode<synchronous>, transform_indices = @transform_2, window_bounds = array<i64: 104, 1>}, {transform_indices = @transform_3, window_bounds = array<i64: 1, 512>}]} {
    %c0 = arith.constant 0 : index
    %c0_0 = arith.constant 0 : index
    %0 = vector.load %arg2[%c0, %c0_0] : memref<104x32xf32, #tpu.memory_space<vmem>>, vector<32x2xf32>
    %c0_1 = arith.constant 0 : index
    %c0_2 = arith.constant 0 : index
    %1 = vector.load %arg1[%c0_1, %c0_2] : memref<512x2xf32, #tpu.memory_space<vmem>>, vector<512x2xf32>
    %cst = arith.constant dense<0.000000e+00> : vector<32x512xf32>
    %2 = tpu.matmul %0, %1, %cst {dimension_numbers = #tpu.dot_dimension_numbers<[1], [1], [0], [0], [0, 0, 1, 0], [], []>} : vector<32x2xf32>, vector<512x2xf32>, vector<32x512xf32> -> vector<32x512xf32>
    %c0_3 = arith.constant 0 : index
    %c0_4 = arith.constant 0 : index
    %3 = vector.load %arg3[%c0_3, %c0_4] : memref<104x1xf32, #tpu.memory_space<vmem>>, vector<32x1xf32>
    %4 = vector.broadcast %3 : vector<32x1xf32> to vector<32x512xf32>
    %5 = arith.addf %2, %4 : vector<32x512xf32>
    %6 = math.tanh %5 : vector<32x512xf32>
    %c32 = arith.constant 32 : index
    %c0_5 = arith.constant 0 : index
    %7 = vector.load %arg2[%c32, %c0_5] : memref<104x32xf32, #tpu.memory_space<vmem>>, vector<32x32xf32>
    %c32_6 = arith.constant 32 : index
    %c0_7 = arith.constant 0 : index
    %8 = vector.load %arg3[%c32_6, %c0_7] : memref<104x1xf32, #tpu.memory_space<vmem>>, vector<32x1xf32>
    %cst_8 = arith.constant dense<0.000000e+00> : vector<32x512xf32>
    %9 = tpu.matmul %7, %6, %cst_8 {dimension_numbers = #tpu.dot_dimension_numbers<[1], [0], [0], [1], [0, 0, 1, 1], [], []>} : vector<32x32xf32>, vector<32x512xf32>, vector<32x512xf32> -> vector<32x512xf32>
    %10 = vector.broadcast %8 : vector<32x1xf32> to vector<32x512xf32>
    %11 = arith.addf %9, %10 : vector<32x512xf32>
    %12 = math.tanh %11 : vector<32x512xf32>
    %c64 = arith.constant 64 : index
    %c0_9 = arith.constant 0 : index
    %13 = vector.load %arg2[%c64, %c0_9] : memref<104x32xf32, #tpu.memory_space<vmem>>, vector<32x32xf32>
    %c64_10 = arith.constant 64 : index
    %c0_11 = arith.constant 0 : index
    %14 = vector.load %arg3[%c64_10, %c0_11] : memref<104x1xf32, #tpu.memory_space<vmem>>, vector<32x1xf32>
    %cst_12 = arith.constant dense<0.000000e+00> : vector<32x512xf32>
    %15 = tpu.matmul %13, %12, %cst_12 {dimension_numbers = #tpu.dot_dimension_numbers<[1], [0], [0], [1], [0, 0, 1, 1], [], []>} : vector<32x32xf32>, vector<32x512xf32>, vector<32x512xf32> -> vector<32x512xf32>
    %16 = vector.broadcast %14 : vector<32x1xf32> to vector<32x512xf32>
    %17 = arith.addf %15, %16 : vector<32x512xf32>
    %18 = math.tanh %17 : vector<32x512xf32>
    %c96 = arith.constant 96 : index
    %c0_13 = arith.constant 0 : index
    %19 = vector.load %arg2[%c96, %c0_13] : memref<104x32xf32, #tpu.memory_space<vmem>>, vector<1x32xf32>
    %c96_14 = arith.constant 96 : index
    %c0_15 = arith.constant 0 : index
    %20 = vector.load %arg3[%c96_14, %c0_15] : memref<104x1xf32, #tpu.memory_space<vmem>>, vector<1x1xf32>
    %cst_16 = arith.constant dense<0.000000e+00> : vector<1x512xf32>
    %21 = tpu.matmul %19, %18, %cst_16 {dimension_numbers = #tpu.dot_dimension_numbers<[1], [0], [0], [1], [0, 0, 1, 1], [], []>} : vector<1x32xf32>, vector<32x512xf32>, vector<1x512xf32> -> vector<1x512xf32>
    %22 = vector.broadcast %20 : vector<1x1xf32> to vector<1x512xf32>
    %23 = arith.addf %21, %22 : vector<1x512xf32>
    %c0_17 = arith.constant 0 : index
    %c0_18 = arith.constant 0 : index
    %24 = vector.load %arg4[%c0_17, %c0_18] : memref<1x512xf32, #tpu.memory_space<vmem>>, vector<1x512xf32>
    tpu.vector_store %arg4[%c0_17, %c0_18], %23 {strides = array<i32>} : memref<1x512xf32, #tpu.memory_space<vmem>>, vector<1x512xf32>,
    return
  }
  func.func @transform_0(%arg0: i32) -> (i32, i32) {
    %c0_i32 = arith.constant 0 : i32
    %c0_i32_0 = arith.constant 0 : i32
    return %arg0, %c0_i32 : i32, i32
  }
  func.func @transform_1(%arg0: i32) -> (i32, i32) {
    %c0_i32 = arith.constant 0 : i32
    %c0_i32_0 = arith.constant 0 : i32
    %c0_i32_1 = arith.constant 0 : i32
    return %c0_i32, %c0_i32_0 : i32, i32
  }
  func.func @transform_2(%arg0: i32) -> (i32, i32) {
    %c0_i32 = arith.constant 0 : i32
    %c0_i32_0 = arith.constant 0 : i32
    %c0_i32_1 = arith.constant 0 : i32
    return %c0_i32, %c0_i32_0 : i32, i32
  }
  func.func @transform_3(%arg0: i32) -> (i32, i32) {
    %c0_i32 = arith.constant 0 : i32
    %c0_i32_0 = arith.constant 0 : i32
    return %c0_i32, %arg0 : i32, i32
  }
}

</mosaic_0001>

<llo_original>
// kernel: tpu_custom_call.1
$region0: #{tpu_custom_call.1}
  #allocation0 [shape = 'u32[]', space=smem, size = 0x4, offset = 0x4, fixed_abs, tag = 'smem constant byte address 0x4 - core index']
  #allocation1 [shape = 'u32[72,128]{1,0:T(1,128)}', space=vmem, size = 0x9000, scoped, tag = 'internal scratch']
  %s0 = inlined_call_operand.vmem [shape: f32[2048,2], index: 0, kind: input, shape index: {}]
  %s1 = inlined_call_operand.vmem [shape: f32[104,32], index: 1, kind: input, shape index: {}]
  %s2 = inlined_call_operand.vmem [shape: f32[104,1], index: 2, kind: input, shape index: {}]
  %s3 = inlined_call_operand.hbm [shape: f32[1,2048], index: 3, kind: output, shape index: {}]
  %s4 = sld [smem:[#allocation0]]
  $region45: #{tpu_custom_call.1} parent=0
    _
  %s6 = ssub.s32 1, %s4
  %s7 = scalar_select 0, %s6, %s4
  $region1: #{tpu_custom_call.1} parent=0
    #allocation2 [shape = 'u8[4096]{0}', space=vmem, size = 0x1000, scoped, tag = 'output window, operand 0']
    #allocation3 [shape = 's32[2]{0}', space=sflag, size = 0x8, scoped, tag = 'scoped memory for tpu_custom_call.1']
    %8 = vsyncpa [#allocation3], 0
    %s9 = scalar_lea.sflag [#allocation3], 1
    %10 = vsyncpa %s9, 0
    loop: start=0, step=1, limit=6
    $region2: #{tpu_custom_call.1} parent=1 // loop_pre_header
      _
    $region3: #{tpu_custom_call.1} parent=1 // loop_header
      %s12 = sphi 0, %s16
      %p13 = scmp.ge.s32.totalorder %s12, 6
      %s22 = sphi 0, %s24
      %s25 = sphi 0, %s22
      %s26 = sphi 0, %s25
      %s42 = sphi 0, %s26
      %s46 = sphi 0, %s46
      %s48 = sphi 0, %s46
      %s49 = sphi 0, %s48
      %s63 = sphi 0, %s49
      %s67 = sphi 0, %s67
      %s69 = sphi 0, %s67
      %s70 = sphi 0, %s69
      %s84 = sphi 0, %s70
      %s90 = sphi 0, %s92
      %s93 = sphi 0, %s90
      %s94 = sphi 0, %s93
      %s110 = sphi 0, %s94
    $region4: #{tpu_custom_call.1} parent=1 // loop_header_branch
      %15 = sbr.rel (%p13) target = $region8
    $region5: #{tpu_custom_call.1} parent=1 // loop_body
      %s17 = ssub.s32 %s12, 1
      %s18 = ssub.s32 %s12, 2
      %s19 = sadd.s32 %s12, 1
      %s20 = ssub.s32 %s12, %s19
      %p21 = scmp.eq.s32.totalorder %s20, 0
      %s23 = sadd.s32 %s22, 1
      %s24 = scalar_select %p21, %s22, %s23
      %p27 = pneg %p21
      %p28 = scmp.eq.s32.totalorder %s12, 3
      %p29 = por %p27, %p28
      %p30 = scmp.ne.s32.totalorder %s22, %s25
      %p31 = scmp.eq.s32.totalorder %s12, 0
      %p32 = por %p30, %p31
      %p33 = scmp.ne.s32.totalorder %s22, %s25
      %p34 = scmp.eq.s32.totalorder %s17, 3
      %p35 = por %p33, %p34
      %p36 = scmp.ne.s32.totalorder %s25, %s26
      %p37 = scmp.eq.s32.totalorder %s17, 0
      %p38 = por %p36, %p37
      %p39 = scmp.ne.s32.totalorder %s25, %s26
      %p40 = scmp.eq.s32.totalorder %s18, 3
      %p41 = por %p39, %p40
      %p43 = scmp.ne.s32.totalorder %s26, %s42
      %p44 = scmp.eq.s32.totalorder %s18, 0
      %p45 = por %p43, %p44
      %s47 = sadd.s32 %s46, 1
      %p50 = scmp.eq.s32.totalorder %s12, 3
      %p51 = scmp.ne.s32.totalorder %s46, %s48
      %p52 = scmp.eq.s32.totalorder %s12, 0
      %p53 = por %p51, %p52
      %p54 = scmp.ne.s32.totalorder %s46, %s48
      %p55 = scmp.eq.s32.totalorder %s17, 3
      %p56 = por %p54, %p55
      %p57 = scmp.ne.s32.totalorder %s48, %s49
      %p58 = scmp.eq.s32.totalorder %s17, 0
      %p59 = por %p57, %p58
      %p60 = scmp.ne.s32.totalorder %s48, %s49
      %p61 = scmp.eq.s32.totalorder %s18, 3
      %p62 = por %p60, %p61
      %p64 = scmp.ne.s32.totalorder %s49, %s63
      %p65 = scmp.eq.s32.totalorder %s18, 0
      %p66 = por %p64, %p65
      %s68 = sadd.s32 %s67, 1
      %p71 = scmp.eq.s32.totalorder %s12, 3
      %p72 = scmp.ne.s32.totalorder %s67, %s69
      %p73 = scmp.eq.s32.totalorder %s12, 0
      %p74 = por %p72, %p73
      %p75 = scmp.ne.s32.totalorder %s67, %s69
      %p76 = scmp.eq.s32.totalorder %s17, 3
      %p77 = por %p75, %p76
      %p78 = scmp.ne.s32.totalorder %s69, %s70
      %p79 = scmp.eq.s32.totalorder %s17, 0
      %p80 = por %p78, %p79
      %p81 = scmp.ne.s32.totalorder %s69, %s70
      %p82 = scmp.eq.s32.totalorder %s18, 3
      %p83 = por %p81, %p82
      %p85 = scmp.ne.s32.totalorder %s70, %s84
      %p86 = scmp.eq.s32.totalorder %s18, 0
      %p87 = por %p85, %p86
      %s88 = ssub.s32 %s12, %s19
      %p89 = scmp.eq.s32.totalorder %s88, 0
      %s91 = sadd.s32 %s90, 1
      %s92 = scalar_select %p89, %s90, %s91
      %p95 = pneg %p89
      %p96 = scmp.eq.s32.totalorder %s12, 3
      %p97 = por %p95, %p96
      %p98 = scmp.ne.s32.totalorder %s90, %s93
      %p99 = scmp.eq.s32.totalorder %s12, 0
      %p100 = por %p98, %p99
      %p101 = scmp.ne.s32.totalorder %s90, %s93
      %p102 = scmp.eq.s32.totalorder %s17, 3
      %p103 = por %p101, %p102
      %p104 = scmp.ne.s32.totalorder %s93, %s94
      %p105 = scmp.eq.s32.totalorder %s17, 0
      %p106 = por %p104, %p105
      %p107 = scmp.ne.s32.totalorder %s93, %s94
      %p108 = scmp.eq.s32.totalorder %s18, 3
      %p109 = por %p107, %p108
      %p111 = scmp.ne.s32.totalorder %s94, %s110
      %p112 = scmp.eq.s32.totalorder %s18, 0
      %p113 = por %p111, %p112
      %p114 = scmp.le.s32.totalorder 1, %s12
      %p115 = scmp.lt.s32.totalorder %s12, 5
      %p116 = pnand %p114, %p115
      %p117 = pneg %p116
      // Predicated region
      $region9: #{tpu_custom_call.1} parent=5 // pred_check
        _
      $region10: #{tpu_custom_call.1} parent=5 // pred_check_branch
        %119 = sbr.rel (%p116) target = $region12
      $region11: #{tpu_custom_call.1} parent=5 // pred_region
        %s120 = ssub.s32 %s12, 1
        // Predicated region
        $region13: #{tpu_custom_call.1} parent=11 // pred_check
          %p121 = pneg %p59
        $region14: #{tpu_custom_call.1} parent=11 // pred_check_branch
          %123 = sbr.rel (%p121) target = $region16
        $region15: #{tpu_custom_call.1} parent=11 // pred_region
          _
        $region16: #{tpu_custom_call.1} parent=11 // pred_fallthru
          _
        // Predicated region
        $region17: #{tpu_custom_call.1} parent=11 // pred_check
          %p124 = pneg %p80
        $region18: #{tpu_custom_call.1} parent=11 // pred_check_branch
          %126 = sbr.rel (%p124) target = $region20
        $region19: #{tpu_custom_call.1} parent=11 // pred_region
          _
        $region20: #{tpu_custom_call.1} parent=11 // pred_fallthru
          _
      $region12: #{tpu_custom_call.1} parent=5 // pred_fallthru
        _
      %p127 = scmp.lt.s32.totalorder %s12, 4
      // Predicated region
      $region21: #{tpu_custom_call.1} parent=5 // pred_check
        %p128 = pneg %p127
      $region22: #{tpu_custom_call.1} parent=5 // pred_check_branch
        %130 = sbr.rel (%p128) target = $region24
      $region23: #{tpu_custom_call.1} parent=5 // pred_region
        // Predicated region
        $region25: #{tpu_custom_call.1} parent=23 // pred_check
          %p131 = pneg %p32
        $region26: #{tpu_custom_call.1} parent=23 // pred_check_branch
          %133 = sbr.rel (%p131) target = $region28
        $region27: #{tpu_custom_call.1} parent=23 // pred_region
          %s134 = smul.u32 64, %s12
          %p135 = scmp.lt.s32.totalorder %s134, 255
          %s136 = scalar_select %p135, %s134, 255
          %s137 = smul.addr %s136, 8
          %s138 = scalar_lea.vmem %s0, %s137
          %s139 = smul.u32 64, %s12
        $region28: #{tpu_custom_call.1} parent=23 // pred_fallthru
          _
      $region24: #{tpu_custom_call.1} parent=5 // pred_fallthru
        _
      %p140 = scmp.le.s32.totalorder 1, %s12
      %p141 = scmp.lt.s32.totalorder %s12, 5
      %p142 = pnand %p140, %p141
      %p143 = pneg %p142
      // Predicated region
      $region29: #{tpu_custom_call.1} parent=5 // pred_check
        _
      $region30: #{tpu_custom_call.1} parent=5 // pred_check_branch
        %145 = sbr.rel (%p142) target = $region32
      $region31: #{tpu_custom_call.1} parent=5 // pred_region
        %s146 = ssub.s32 %s12, 1
        %s147 = smul.u32 64, %s17
        %p148 = scmp.lt.s32.totalorder %s147, 255
        %s149 = scalar_select %p148, %s147, 255
        %s150 = smul.addr %s149, 8
        %s151 = scalar_lea.vmem %s0, %s150
        %p152 = pneg %p38
        %p153 = pneg %p35
        %p154 = pneg %p59
        %p155 = pneg %p56
        %p156 = pneg %p80
        %p157 = pneg %p77
        %p158 = pneg %p106
        %p159 = pneg %p103
        %s160 = sand.u32 %s93, 1
        %s161 = scalar_lea.sflag [#allocation3], %s160
        %s162 = sand.u32 %s93, 1
        %s163 = smul.addr %s162, 4
        %s164 = scalar_lea.vmem [#allocation2], %s163
        %s165 = smul.u32 64, %s17
        %p166 = scmp.lt.s32.totalorder %s165, 255
        %s167 = scalar_select %p166, %s165, 255
        %s168 = smul.addr %s167, 8
        %s169 = scalar_lea.vmem %s0, %s168
        %s170 = smul.u32 64, %s17
        %s171 = smul.u32 4, %s17
        %v172 = vld [vmem:[%s1] sm:$0xff]
        %v173 = vld [vmem:[%s1 + $0x8] sm:$0xff]
        %v174 = vld [vmem:[%s1 + $0x10] sm:$0xff]
        %v175 = vld [vmem:[%s1 + $0x18] sm:$0xff]
        %v176 = vld [vmem:[%s169] sm:$0xff]
        %v177 = vld [vmem:[%s169 + $0x8] sm:$0xff]
        %v178 = vld [vmem:[%s169 + $0x10] sm:$0xff]
        %v179 = vld [vmem:[%s169 + $0x18] sm:$0xff]
        %v180 = vld [vmem:[%s169 + $0x20] sm:$0xff]
        %v181 = vld [vmem:[%s169 + $0x28] sm:$0xff]
        %v182 = vld [vmem:[%s169 + $0x30] sm:$0xff]
        %v183 = vld [vmem:[%s169 + $0x38] sm:$0xff]
        %v184 = vld [vmem:[%s169 + $0x40] sm:$0xff]
        %v185 = vld [vmem:[%s169 + $0x48] sm:$0xff]
        %v186 = vld [vmem:[%s169 + $0x50] sm:$0xff]
        %v187 = vld [vmem:[%s169 + $0x58] sm:$0xff]
        %v188 = vld [vmem:[%s169 + $0x60] sm:$0xff]
        %v189 = vld [vmem:[%s169 + $0x68] sm:$0xff]
        %v190 = vld [vmem:[%s169 + $0x70] sm:$0xff]
        %v191 = vld [vmem:[%s169 + $0x78] sm:$0xff]
        %v192 = vld [vmem:[%s169 + $0x80] sm:$0xff]
        %v193 = vld [vmem:[%s169 + $0x88] sm:$0xff]
        %v194 = vld [vmem:[%s169 + $0x90] sm:$0xff]
        %v195 = vld [vmem:[%s169 + $0x98] sm:$0xff]
        %v196 = vld [vmem:[%s169 + $0xa0] sm:$0xff]
        %v197 = vld [vmem:[%s169 + $0xa8] sm:$0xff]
        %v198 = vld [vmem:[%s169 + $0xb0] sm:$0xff]
        %v199 = vld [vmem:[%s169 + $0xb8] sm:$0xff]
        %v200 = vld [vmem:[%s169 + $0xc0] sm:$0xff]
        %v201 = vld [vmem:[%s169 + $0xc8] sm:$0xff]
        %v202 = vld [vmem:[%s169 + $0xd0] sm:$0xff]
        %v203 = vld [vmem:[%s169 + $0xd8] sm:$0xff]
        %v204 = vld [vmem:[%s169 + $0xe0] sm:$0xff]
        %v205 = vld [vmem:[%s169 + $0xe8] sm:$0xff]
        %v206 = vld [vmem:[%s169 + $0xf0] sm:$0xff]
        %v207 = vld [vmem:[%s169 + $0xf8] sm:$0xff]
        %v208 = vld [vmem:[%s169 + $0x100] sm:$0xff]
        %v209 = vld [vmem:[%s169 + $0x108] sm:$0xff]
        %v210 = vld [vmem:[%s169 + $0x110] sm:$0xff]
        %v211 = vld [vmem:[%s169 + $0x118] sm:$0xff]
        %v212 = vld [vmem:[%s169 + $0x120] sm:$0xff]
        %v213 = vld [vmem:[%s169 + $0x128] sm:$0xff]
        %v214 = vld [vmem:[%s169 + $0x130] sm:$0xff]
        %v215 = vld [vmem:[%s169 + $0x138] sm:$0xff]
        %v216 = vld [vmem:[%s169 + $0x140] sm:$0xff]
        %v217 = vld [vmem:[%s169 + $0x148] sm:$0xff]
        %v218 = vld [vmem:[%s169 + $0x150] sm:$0xff]
        %v219 = vld [vmem:[%s169 + $0x158] sm:$0xff]
        %v220 = vld [vmem:[%s169 + $0x160] sm:$0xff]
        %v221 = vld [vmem:[%s169 + $0x168] sm:$0xff]
        %v222 = vld [vmem:[%s169 + $0x170] sm:$0xff]
        %v223 = vld [vmem:[%s169 + $0x178] sm:$0xff]
        %v224 = vld [vmem:[%s169 + $0x180] sm:$0xff]
        %v225 = vld [vmem:[%s169 + $0x188] sm:$0xff]
        %v226 = vld [vmem:[%s169 + $0x190] sm:$0xff]
        %v227 = vld [vmem:[%s169 + $0x198] sm:$0xff]
        %v228 = vld [vmem:[%s169 + $0x1a0] sm:$0xff]
        %v229 = vld [vmem:[%s169 + $0x1a8] sm:$0xff]
        %v230 = vld [vmem:[%s169 + $0x1b0] sm:$0xff]
        %v231 = vld [vmem:[%s169 + $0x1b8] sm:$0xff]
        %v232 = vld [vmem:[%s169 + $0x1c0] sm:$0xff]
        %v233 = vld [vmem:[%s169 + $0x1c8] sm:$0xff]
        %v234 = vld [vmem:[%s169 + $0x1d0] sm:$0xff]
        %v235 = vld [vmem:[%s169 + $0x1d8] sm:$0xff]
        %v236 = vld [vmem:[%s169 + $0x1e0] sm:$0xff]
        %v237 = vld [vmem:[%s169 + $0x1e8] sm:$0xff]
        %v238 = vld [vmem:[%s169 + $0x1f0] sm:$0xff]
        %v239 = vld [vmem:[%s169 + $0x1f8] sm:$0xff]
        %v240 = vld [vmem:[%s2] sm:$0xff]
        %v241 = vld [vmem:[%s2 + $0x8] sm:$0xff]
        %v242 = vld [vmem:[%s2 + $0x10] sm:$0xff]
        %v243 = vld [vmem:[%s2 + $0x18] sm:$0xff]
        %245 = vset.pattern.permute.xlu0 0
        %246 = vperm.xlu0 %245, %v240
        %v247 = vpop.permute.xlu0 %246
        %250 = vset.pattern.permute.xlu0 0
        %251 = vperm.xlu0 %250, %v241
        %v252 = vpop.permute.xlu0 %251
        %255 = vset.pattern.permute.xlu0 0
        %256 = vperm.xlu0 %255, %v242
        %v257 = vpop.permute.xlu0 %256
        %260 = vset.pattern.permute.xlu0 0
        %261 = vperm.xlu0 %260, %v243
        %v262 = vpop.permute.xlu0 %261
        %vm264 = vcmask 15360
        %v266 = vsel %vm264, %v172, 0
        %v269 = vsel %vm264, %v173, 0
        %v272 = vsel %vm264, %v174, 0
        %v275 = vsel %vm264, %v175, 0
        %v278 = vsel %vm264, %v176, 0
        %v281 = vsel %vm264, %v177, 0
        %v284 = vsel %vm264, %v178, 0
        %v287 = vsel %vm264, %v179, 0
        %v290 = vsel %vm264, %v180, 0
        %v293 = vsel %vm264, %v181, 0
        %v296 = vsel %vm264, %v182, 0
        %v299 = vsel %vm264, %v183, 0
        %v302 = vsel %vm264, %v184, 0
        %v305 = vsel %vm264, %v185, 0
        %v308 = vsel %vm264, %v186, 0
        %v311 = vsel %vm264, %v187, 0
        %v314 = vsel %vm264, %v188, 0
        %v317 = vsel %vm264, %v189, 0
        %v320 = vsel %vm264, %v190, 0
        %v323 = vsel %vm264, %v191, 0
        %v326 = vsel %vm264, %v192, 0
        %v329 = vsel %vm264, %v193, 0
        %v332 = vsel %vm264, %v194, 0
        %v335 = vsel %vm264, %v195, 0
        %v338 = vsel %vm264, %v196, 0
        %v341 = vsel %vm264, %v197, 0
        %v344 = vsel %vm264, %v198, 0
        %v347 = vsel %vm264, %v199, 0
        %v350 = vsel %vm264, %v200, 0
        %v353 = vsel %vm264, %v201, 0
        %v356 = vsel %vm264, %v202, 0
        %v359 = vsel %vm264, %v203, 0
        %v362 = vsel %vm264, %v204, 0
        %v365 = vsel %vm264, %v205, 0
        %v368 = vsel %vm264, %v206, 0
        %v371 = vsel %vm264, %v207, 0
        %v374 = vsel %vm264, %v208, 0
        %v377 = vsel %vm264, %v209, 0
        %v380 = vsel %vm264, %v210, 0
        %v383 = vsel %vm264, %v211, 0
        %v386 = vsel %vm264, %v212, 0
        %v389 = vsel %vm264, %v213, 0
        %v392 = vsel %vm264, %v214, 0
        %v395 = vsel %vm264, %v215, 0
        %v398 = vsel %vm264, %v216, 0
        %v401 = vsel %vm264, %v217, 0
        %v404 = vsel %vm264, %v218, 0
        %v407 = vsel %vm264, %v219, 0
        %v410 = vsel %vm264, %v220, 0
        %v413 = vsel %vm264, %v221, 0
        %v416 = vsel %vm264, %v222, 0
        %v419 = vsel %vm264, %v223, 0
        %v422 = vsel %vm264, %v224, 0
        %v425 = vsel %vm264, %v225, 0
        %v428 = vsel %vm264, %v226, 0
        %v431 = vsel %vm264, %v227, 0
        %v434 = vsel %vm264, %v228, 0
        %v437 = vsel %vm264, %v229, 0
        %v440 = vsel %vm264, %v230, 0
        %v443 = vsel %vm264, %v231, 0
        %v446 = vsel %vm264, %v232, 0
        %v449 = vsel %vm264, %v233, 0
        %v452 = vsel %vm264, %v234, 0
        %v455 = vsel %vm264, %v235, 0
        %v458 = vsel %vm264, %v236, 0
        %v461 = vsel %vm264, %v237, 0
        %v464 = vsel %vm264, %v238, 0
        %v467 = vsel %vm264, %v239, 0
        %469 = vmatpush.xpose.msra.mxu0 %v323
        %470 = vmatpush.xpose.msra.mxu0 %v320
        %471 = vmatpush.xpose.msra.mxu0 %v317
        %472 = vmatpush.xpose.msra.mxu0 %v314
        %473 = vmatpush.xpose.msra.mxu0 %v311
        %474 = vmatpush.xpose.msra.mxu0 %v308
        %475 = vmatpush.xpose.msra.mxu0 %v305
        %476 = vmatpush.xpose.msra.mxu0 %v302
        %477 = vmatpush.xpose.msra.mxu0 %v299
        %478 = vmatpush.xpose.msra.mxu0 %v296
        %479 = vmatpush.xpose.msra.mxu0 %v293
        %480 = vmatpush.xpose.msra.mxu0 %v290
        %481 = vmatpush.xpose.msra.mxu0 %v287
        %482 = vmatpush.xpose.msra.mxu0 %v284
        %483 = vmatpush.xpose.msra.mxu0 %v281
        %484 = vmatpush.xpose.msra.mxu0 %v278
        %485 = vmatmul.f32.gmra.mxu0 %v266
        %v486 = vpop.f32.mrf.mxu0
        %v487 = vadd.f32 %v247, %v486
        %488 = vmatmul.f32.gmra.mxu0 %v269
        %v489 = vpop.f32.mrf.mxu0
        %v490 = vadd.f32 %v252, %v489
        %491 = vmatmul.f32.gmra.mxu0 %v272
        %v492 = vpop.f32.mrf.mxu0
        %v493 = vadd.f32 %v257, %v492
        %494 = vmatmul.f32.gmra.mxu0 %v275
        %v495 = vpop.f32.mrf.mxu0
        %v496 = vadd.f32 %v262, %v495
        %497 = vdwg.mxu0
        %498 = vmatpush.xpose.msra.mxu0 %v371
        %499 = vmatpush.xpose.msra.mxu0 %v368
        %500 = vmatpush.xpose.msra.mxu0 %v365
        %501 = vmatpush.xpose.msra.mxu0 %v362
        %502 = vmatpush.xpose.msra.mxu0 %v359
        %503 = vmatpush.xpose.msra.mxu0 %v356
        %504 = vmatpush.xpose.msra.mxu0 %v353
        %505 = vmatpush.xpose.msra.mxu0 %v350
        %506 = vmatpush.xpose.msra.mxu0 %v347
        %507 = vmatpush.xpose.msra.mxu0 %v344
        %508 = vmatpush.xpose.msra.mxu0 %v341
        %509 = vmatpush.xpose.msra.mxu0 %v338
        %510 = vmatpush.xpose.msra.mxu0 %v335
        %511 = vmatpush.xpose.msra.mxu0 %v332
        %512 = vmatpush.xpose.msra.mxu0 %v329
        %513 = vmatpush.xpose.msra.mxu0 %v326
        %514 = vmatmul.f32.gmra.mxu0 %v266
        %v515 = vpop.f32.mrf.mxu0
        %v516 = vadd.f32 %v247, %v515
        %517 = vmatmul.f32.gmra.mxu0 %v269
        %v518 = vpop.f32.mrf.mxu0
        %v519 = vadd.f32 %v252, %v518
        %520 = vmatmul.f32.gmra.mxu0 %v272
        %v521 = vpop.f32.mrf.mxu0
        %v522 = vadd.f32 %v257, %v521
        %523 = vmatmul.f32.gmra.mxu0 %v275
        %v524 = vpop.f32.mrf.mxu0
        %v525 = vadd.f32 %v262, %v524
        %526 = vdwg.mxu0
        %527 = vmatpush.xpose.msra.mxu0 %v419
        %528 = vmatpush.xpose.msra.mxu0 %v416
        %529 = vmatpush.xpose.msra.mxu0 %v413
        %530 = vmatpush.xpose.msra.mxu0 %v410
        %531 = vmatpush.xpose.msra.mxu0 %v407
        %532 = vmatpush.xpose.msra.mxu0 %v404
        %533 = vmatpush.xpose.msra.mxu0 %v401
        %534 = vmatpush.xpose.msra.mxu0 %v398
        %535 = vmatpush.xpose.msra.mxu0 %v395
        %536 = vmatpush.xpose.msra.mxu0 %v392
        %537 = vmatpush.xpose.msra.mxu0 %v389
        %538 = vmatpush.xpose.msra.mxu0 %v386
        %539 = vmatpush.xpose.msra.mxu0 %v383
        %540 = vmatpush.xpose.msra.mxu0 %v380
        %541 = vmatpush.xpose.msra.mxu0 %v377
        %542 = vmatpush.xpose.msra.mxu0 %v374
        %543 = vmatmul.f32.gmra.mxu0 %v266
        %v544 = vpop.f32.mrf.mxu0
        %v545 = vadd.f32 %v247, %v544
        %546 = vmatmul.f32.gmra.mxu0 %v269
        %v547 = vpop.f32.mrf.mxu0
        %v548 = vadd.f32 %v252, %v547
        %549 = vmatmul.f32.gmra.mxu0 %v272
        %v550 = vpop.f32.mrf.mxu0
        %v551 = vadd.f32 %v257, %v550
        %552 = vmatmul.f32.gmra.mxu0 %v275
        %v553 = vpop.f32.mrf.mxu0
        %v554 = vadd.f32 %v262, %v553
        %555 = vdwg.mxu0
        %556 = vmatpush.xpose.msra.mxu0 %v467
        %557 = vmatpush.xpose.msra.mxu0 %v464
        %558 = vmatpush.xpose.msra.mxu0 %v461
        %559 = vmatpush.xpose.msra.mxu0 %v458
        %560 = vmatpush.xpose.msra.mxu0 %v455
        %561 = vmatpush.xpose.msra.mxu0 %v452
        %562 = vmatpush.xpose.msra.mxu0 %v449
        %563 = vmatpush.xpose.msra.mxu0 %v446
        %564 = vmatpush.xpose.msra.mxu0 %v443
        %565 = vmatpush.xpose.msra.mxu0 %v440
        %566 = vmatpush.xpose.msra.mxu0 %v437
        %567 = vmatpush.xpose.msra.mxu0 %v434
        %568 = vmatpush.xpose.msra.mxu0 %v431
        %569 = vmatpush.xpose.msra.mxu0 %v428
        %570 = vmatpush.xpose.msra.mxu0 %v425
        %571 = vmatpush.xpose.msra.mxu0 %v422
        %572 = vmatmul.f32.gmra.mxu0 %v266
        %v573 = vpop.f32.mrf.mxu0
        %v574 = vadd.f32 %v247, %v573
        %575 = vmatmul.f32.gmra.mxu0 %v269
        %v576 = vpop.f32.mrf.mxu0
        %v577 = vadd.f32 %v252, %v576
        %578 = vmatmul.f32.gmra.mxu0 %v272
        %v579 = vpop.f32.mrf.mxu0
        %v580 = vadd.f32 %v257, %v579
        %581 = vmatmul.f32.gmra.mxu0 %v275
        %v582 = vpop.f32.mrf.mxu0
        %v583 = vadd.f32 %v262, %v582
        %584 = vdwg.mxu0
        %v585 = vtanh.pop %v487
        %v586 = vtanh.pop %v516
        %v587 = vtanh.pop %v545
        %v588 = vtanh.pop %v574
        %v589 = vtanh.pop %v490
        %v590 = vtanh.pop %v519
        %v591 = vtanh.pop %v548
        %v592 = vtanh.pop %v577
        %v593 = vtanh.pop %v493
        %v594 = vtanh.pop %v522
        %v595 = vtanh.pop %v551
        %v596 = vtanh.pop %v580
        %v597 = vtanh.pop %v496
        %v598 = vtanh.pop %v525
        %v599 = vtanh.pop %v554
        %v600 = vtanh.pop %v583
        %v601 = vld [vmem:[%s1 + $0x20] sm:$0xff]
        %v602 = vld [vmem:[%s1 + $0x28] sm:$0xff]
        %v603 = vld [vmem:[%s1 + $0x30] sm:$0xff]
        %v604 = vld [vmem:[%s1 + $0x38] sm:$0xff]
        %v605 = vld [vmem:[%s2 + $0x20] sm:$0xff]
        %v606 = vld [vmem:[%s2 + $0x28] sm:$0xff]
        %v607 = vld [vmem:[%s2 + $0x30] sm:$0xff]
        %v608 = vld [vmem:[%s2 + $0x38] sm:$0xff]
        %610 = vset.pattern.permute.xlu0 0
        %611 = vperm.xlu0 %610, %v605
        %v612 = vpop.permute.xlu0 %611
        %615 = vset.pattern.permute.xlu0 0
        %616 = vperm.xlu0 %615, %v606
        %v617 = vpop.permute.xlu0 %616
        %620 = vset.pattern.permute.xlu0 0
        %621 = vperm.xlu0 %620, %v607
        %v622 = vpop.permute.xlu0 %621
        %625 = vset.pattern.permute.xlu0 0
        %626 = vperm.xlu0 %625, %v608
        %v627 = vpop.permute.xlu0 %626
        %vm629 = vcmask 261120
        %v631 = vsel %vm629, %v601, 0
        %v634 = vsel %vm629, %v602, 0
        %v637 = vsel %vm629, %v603, 0
        %v640 = vsel %vm629, %v604, 0
        %642 = vmatpush.msra.mxu0 0.0
        %643 = vmatpush.msra.mxu0 0.0
        %644 = vmatpush.msra.mxu0 0.0
        %645 = vmatpush.msra.mxu0 0.0
        %646 = vmatpush.msra.mxu0 0.0
        %647 = vmatpush.msra.mxu0 0.0
        %648 = vmatpush.msra.mxu0 0.0
        %649 = vmatpush.msra.mxu0 0.0
        %650 = vmatpush.msra.mxu0 0.0
        %651 = vmatpush.msra.mxu0 0.0
        %652 = vmatpush.msra.mxu0 0.0
        %653 = vmatpush.msra.mxu0 0.0
        %654 = vmatpush.msra.mxu0 %v597
        %655 = vmatpush.msra.mxu0 %v593
        %656 = vmatpush.msra.mxu0 %v589
        %657 = vmatpush.msra.mxu0 %v585
        %658 = vmatmul.f32.gmra.mxu0 %v631
        %v659 = vpop.f32.mrf.mxu0
        %v660 = vadd.f32 %v612, %v659
        %661 = vmatmul.f32.gmra.mxu0 %v634
        %v662 = vpop.f32.mrf.mxu0
        %v663 = vadd.f32 %v617, %v662
        %664 = vmatmul.f32.gmra.mxu0 %v637
        %v665 = vpop.f32.mrf.mxu0
        %v666 = vadd.f32 %v622, %v665
        %667 = vmatmul.f32.gmra.mxu0 %v640
        %v668 = vpop.f32.mrf.mxu0
        %v669 = vadd.f32 %v627, %v668
        %670 = vdwg.mxu0
        %671 = vmatpush.msra.mxu0 0.0
        %672 = vmatpush.msra.mxu0 0.0
        %673 = vmatpush.msra.mxu0 0.0
        %674 = vmatpush.msra.mxu0 0.0
        %675 = vmatpush.msra.mxu0 0.0
        %676 = vmatpush.msra.mxu0 0.0
        %677 = vmatpush.msra.mxu0 0.0
        %678 = vmatpush.msra.mxu0 0.0
        %679 = vmatpush.msra.mxu0 0.0
        %680 = vmatpush.msra.mxu0 0.0
        %681 = vmatpush.msra.mxu0 0.0
        %682 = vmatpush.msra.mxu0 0.0
        %683 = vmatpush.msra.mxu0 %v598
        %684 = vmatpush.msra.mxu0 %v594
        %685 = vmatpush.msra.mxu0 %v590
        %686 = vmatpush.msra.mxu0 %v586
        %687 = vmatmul.f32.gmra.mxu0 %v631
        %v688 = vpop.f32.mrf.mxu0
        %v689 = vadd.f32 %v612, %v688
        %690 = vmatmul.f32.gmra.mxu0 %v634
        %v691 = vpop.f32.mrf.mxu0
        %v692 = vadd.f32 %v617, %v691
        %693 = vmatmul.f32.gmra.mxu0 %v637
        %v694 = vpop.f32.mrf.mxu0
        %v695 = vadd.f32 %v622, %v694
        %696 = vmatmul.f32.gmra.mxu0 %v640
        %v697 = vpop.f32.mrf.mxu0
        %v698 = vadd.f32 %v627, %v697
        %699 = vdwg.mxu0
        %700 = vmatpush.msra.mxu0 0.0
        %701 = vmatpush.msra.mxu0 0.0
        %702 = vmatpush.msra.mxu0 0.0
        %703 = vmatpush.msra.mxu0 0.0
        %704 = vmatpush.msra.mxu0 0.0
        %705 = vmatpush.msra.mxu0 0.0
        %706 = vmatpush.msra.mxu0 0.0
        %707 = vmatpush.msra.mxu0 0.0
        %708 = vmatpush.msra.mxu0 0.0
        %709 = vmatpush.msra.mxu0 0.0
        %710 = vmatpush.msra.mxu0 0.0
        %711 = vmatpush.msra.mxu0 0.0
        %712 = vmatpush.msra.mxu0 %v599
        %713 = vmatpush.msra.mxu0 %v595
        %714 = vmatpush.msra.mxu0 %v591
        %715 = vmatpush.msra.mxu0 %v587
        %716 = vmatmul.f32.gmra.mxu0 %v631
        %v717 = vpop.f32.mrf.mxu0
        %v718 = vadd.f32 %v612, %v717
        %719 = vmatmul.f32.gmra.mxu0 %v634
        %v720 = vpop.f32.mrf.mxu0
        %v721 = vadd.f32 %v617, %v720
        %722 = vmatmul.f32.gmra.mxu0 %v637
        %v723 = vpop.f32.mrf.mxu0
        %v724 = vadd.f32 %v622, %v723
        %725 = vmatmul.f32.gmra.mxu0 %v640
        %v726 = vpop.f32.mrf.mxu0
        %v727 = vadd.f32 %v627, %v726
        %728 = vdwg.mxu0
        %729 = vmatpush.msra.mxu0 0.0
        %730 = vmatpush.msra.mxu0 0.0
        %731 = vmatpush.msra.mxu0 0.0
        %732 = vmatpush.msra.mxu0 0.0
        %733 = vmatpush.msra.mxu0 0.0
        %734 = vmatpush.msra.mxu0 0.0
        %735 = vmatpush.msra.mxu0 0.0
        %736 = vmatpush.msra.mxu0 0.0
        %737 = vmatpush.msra.mxu0 0.0
        %738 = vmatpush.msra.mxu0 0.0
        %739 = vmatpush.msra.mxu0 0.0
        %740 = vmatpush.msra.mxu0 0.0
        %741 = vmatpush.msra.mxu0 %v600
        %742 = vmatpush.msra.mxu0 %v596
        %743 = vmatpush.msra.mxu0 %v592
        %744 = vmatpush.msra.mxu0 %v588
        %745 = vmatmul.f32.gmra.mxu0 %v631
        %v746 = vpop.f32.mrf.mxu0
        %v747 = vadd.f32 %v612, %v746
        %748 = vmatmul.f32.gmra.mxu0 %v634
        %v749 = vpop.f32.mrf.mxu0
        %v750 = vadd.f32 %v617, %v749
        %751 = vmatmul.f32.gmra.mxu0 %v637
        %v752 = vpop.f32.mrf.mxu0
        %v753 = vadd.f32 %v622, %v752
        %754 = vmatmul.f32.gmra.mxu0 %v640
        %v755 = vpop.f32.mrf.mxu0
        %v756 = vadd.f32 %v627, %v755
        %757 = vdwg.mxu0
        %v758 = vtanh.pop %v660
        %v759 = vtanh.pop %v689
        %v760 = vtanh.pop %v718
        %v761 = vtanh.pop %v747
        %v762 = vtanh.pop %v663
        %v763 = vtanh.pop %v692
        %v764 = vtanh.pop %v721
        %v765 = vtanh.pop %v750
        %v766 = vtanh.pop %v666
        %v767 = vtanh.pop %v695
        %v768 = vtanh.pop %v724
        %v769 = vtanh.pop %v753
        %v770 = vtanh.pop %v669
        %v771 = vtanh.pop %v698
        %v772 = vtanh.pop %v727
        %v773 = vtanh.pop %v756
        %v774 = vld [vmem:[%s1 + $0x40] sm:$0xff]
        %v775 = vld [vmem:[%s1 + $0x48] sm:$0xff]
        %v776 = vld [vmem:[%s1 + $0x50] sm:$0xff]
        %v777 = vld [vmem:[%s1 + $0x58] sm:$0xff]
        %v778 = vld [vmem:[%s2 + $0x40] sm:$0xff]
        %v779 = vld [vmem:[%s2 + $0x48] sm:$0xff]
        %v780 = vld [vmem:[%s2 + $0x50] sm:$0xff]
        %v781 = vld [vmem:[%s2 + $0x58] sm:$0xff]
        %783 = vset.pattern.permute.xlu0 0
        %784 = vperm.xlu0 %783, %v778
        %v785 = vpop.permute.xlu0 %784
        %788 = vset.pattern.permute.xlu0 0
        %789 = vperm.xlu0 %788, %v779
        %v790 = vpop.permute.xlu0 %789
        %793 = vset.pattern.permute.xlu0 0
        %794 = vperm.xlu0 %793, %v780
        %v795 = vpop.permute.xlu0 %794
        %798 = vset.pattern.permute.xlu0 0
        %799 = vperm.xlu0 %798, %v781
        %v800 = vpop.permute.xlu0 %799
        %v803 = vsel %vm629, %v774, 0
        %v806 = vsel %vm629, %v775, 0
        %v809 = vsel %vm629, %v776, 0
        %v812 = vsel %vm629, %v777, 0
        %814 = vmatpush.msra.mxu0 0.0
        %815 = vmatpush.msra.mxu0 0.0
        %816 = vmatpush.msra.mxu0 0.0
        %817 = vmatpush.msra.mxu0 0.0
        %818 = vmatpush.msra.mxu0 0.0
        %819 = vmatpush.msra.mxu0 0.0
        %820 = vmatpush.msra.mxu0 0.0
        %821 = vmatpush.msra.mxu0 0.0
        %822 = vmatpush.msra.mxu0 0.0
        %823 = vmatpush.msra.mxu0 0.0
        %824 = vmatpush.msra.mxu0 0.0
        %825 = vmatpush.msra.mxu0 0.0
        %826 = vmatpush.msra.mxu0 %v770
        %827 = vmatpush.msra.mxu0 %v766
        %828 = vmatpush.msra.mxu0 %v762
        %829 = vmatpush.msra.mxu0 %v758
        %830 = vmatmul.f32.gmra.mxu0 %v803
        %v831 = vpop.f32.mrf.mxu0
        %v832 = vadd.f32 %v785, %v831
        %833 = vmatmul.f32.gmra.mxu0 %v806
        %v834 = vpop.f32.mrf.mxu0
        %v835 = vadd.f32 %v790, %v834
        %836 = vmatmul.f32.gmra.mxu0 %v809
        %v837 = vpop.f32.mrf.mxu0
        %v838 = vadd.f32 %v795, %v837
        %839 = vmatmul.f32.gmra.mxu0 %v812
        %v840 = vpop.f32.mrf.mxu0
        %v841 = vadd.f32 %v800, %v840
        %842 = vdwg.mxu0
        %843 = vmatpush.msra.mxu0 0.0
        %844 = vmatpush.msra.mxu0 0.0
        %845 = vmatpush.msra.mxu0 0.0
        %846 = vmatpush.msra.mxu0 0.0
        %847 = vmatpush.msra.mxu0 0.0
        %848 = vmatpush.msra.mxu0 0.0
        %849 = vmatpush.msra.mxu0 0.0
        %850 = vmatpush.msra.mxu0 0.0
        %851 = vmatpush.msra.mxu0 0.0
        %852 = vmatpush.msra.mxu0 0.0
        %853 = vmatpush.msra.mxu0 0.0
        %854 = vmatpush.msra.mxu0 0.0
        %855 = vmatpush.msra.mxu0 %v771
        %856 = vmatpush.msra.mxu0 %v767
        %857 = vmatpush.msra.mxu0 %v763
        %858 = vmatpush.msra.mxu0 %v759
        %859 = vmatmul.f32.gmra.mxu0 %v803
        %v860 = vpop.f32.mrf.mxu0
        %v861 = vadd.f32 %v785, %v860
        %862 = vmatmul.f32.gmra.mxu0 %v806
        %v863 = vpop.f32.mrf.mxu0
        %v864 = vadd.f32 %v790, %v863
        %865 = vmatmul.f32.gmra.mxu0 %v809
        %v866 = vpop.f32.mrf.mxu0
        %v867 = vadd.f32 %v795, %v866
        %868 = vmatmul.f32.gmra.mxu0 %v812
        %v869 = vpop.f32.mrf.mxu0
        %v870 = vadd.f32 %v800, %v869
        %871 = vdwg.mxu0
        %872 = vmatpush.msra.mxu0 0.0
        %873 = vmatpush.msra.mxu0 0.0
        %874 = vmatpush.msra.mxu0 0.0
        %875 = vmatpush.msra.mxu0 0.0
        %876 = vmatpush.msra.mxu0 0.0
        %877 = vmatpush.msra.mxu0 0.0
        %878 = vmatpush.msra.mxu0 0.0
        %879 = vmatpush.msra.mxu0 0.0
        %880 = vmatpush.msra.mxu0 0.0
        %881 = vmatpush.msra.mxu0 0.0
        %882 = vmatpush.msra.mxu0 0.0
        %883 = vmatpush.msra.mxu0 0.0
        %884 = vmatpush.msra.mxu0 %v772
        %885 = vmatpush.msra.mxu0 %v768
        %886 = vmatpush.msra.mxu0 %v764
        %887 = vmatpush.msra.mxu0 %v760
        %888 = vmatmul.f32.gmra.mxu0 %v803
        %v889 = vpop.f32.mrf.mxu0
        %v890 = vadd.f32 %v785, %v889
        %891 = vmatmul.f32.gmra.mxu0 %v806
        %v892 = vpop.f32.mrf.mxu0
        %v893 = vadd.f32 %v790, %v892
        %894 = vmatmul.f32.gmra.mxu0 %v809
        %v895 = vpop.f32.mrf.mxu0
        %v896 = vadd.f32 %v795, %v895
        %897 = vmatmul.f32.gmra.mxu0 %v812
        %v898 = vpop.f32.mrf.mxu0
        %v899 = vadd.f32 %v800, %v898
        %900 = vdwg.mxu0
        %901 = vmatpush.msra.mxu0 0.0
        %902 = vmatpush.msra.mxu0 0.0
        %903 = vmatpush.msra.mxu0 0.0
        %904 = vmatpush.msra.mxu0 0.0
        %905 = vmatpush.msra.mxu0 0.0
        %906 = vmatpush.msra.mxu0 0.0
        %907 = vmatpush.msra.mxu0 0.0
        %908 = vmatpush.msra.mxu0 0.0
        %909 = vmatpush.msra.mxu0 0.0
        %910 = vmatpush.msra.mxu0 0.0
        %911 = vmatpush.msra.mxu0 0.0
        %912 = vmatpush.msra.mxu0 0.0
        %913 = vmatpush.msra.mxu0 %v773
        %914 = vmatpush.msra.mxu0 %v769
        %915 = vmatpush.msra.mxu0 %v765
        %916 = vmatpush.msra.mxu0 %v761
        %917 = vmatmul.f32.gmra.mxu0 %v803
        %v918 = vpop.f32.mrf.mxu0
        %v919 = vadd.f32 %v785, %v918
        %920 = vmatmul.f32.gmra.mxu0 %v806
        %v921 = vpop.f32.mrf.mxu0
        %v922 = vadd.f32 %v790, %v921
        %923 = vmatmul.f32.gmra.mxu0 %v809
        %v924 = vpop.f32.mrf.mxu0
        %v925 = vadd.f32 %v795, %v924
        %926 = vmatmul.f32.gmra.mxu0 %v812
        %v927 = vpop.f32.mrf.mxu0
        %v928 = vadd.f32 %v800, %v927
        %929 = vdwg.mxu0
        %v930 = vtanh.pop %v832
        %v931 = vtanh.pop %v861
        %v932 = vtanh.pop %v890
        %v933 = vtanh.pop %v919
        %v934 = vtanh.pop %v835
        %v935 = vtanh.pop %v864
        %v936 = vtanh.pop %v893
        %v937 = vtanh.pop %v922
        %v938 = vtanh.pop %v838
        %v939 = vtanh.pop %v867
        %v940 = vtanh.pop %v896
        %v941 = vtanh.pop %v925
        %v942 = vtanh.pop %v841
        %v943 = vtanh.pop %v870
        %v944 = vtanh.pop %v899
        %v945 = vtanh.pop %v928
        %v946 = vld [vmem:[%s1 + $0x60] sm:$0x1]
        %v947 = vld [vmem:[%s2 + $0x60] sm:$0x1]
        %949 = vset.pattern.permute.xlu0 0
        %950 = vperm.xlu0 %949, %v947
        %v951 = vpop.permute.xlu0 %950
        %v954 = vsel %vm629, %v946, 0
        %956 = vmatpush.msra.mxu0 0.0
        %957 = vmatpush.msra.mxu0 0.0
        %958 = vmatpush.msra.mxu0 0.0
        %959 = vmatpush.msra.mxu0 0.0
        %960 = vmatpush.msra.mxu0 0.0
        %961 = vmatpush.msra.mxu0 0.0
        %962 = vmatpush.msra.mxu0 0.0
        %963 = vmatpush.msra.mxu0 0.0
        %964 = vmatpush.msra.mxu0 0.0
        %965 = vmatpush.msra.mxu0 0.0
        %966 = vmatpush.msra.mxu0 0.0
        %967 = vmatpush.msra.mxu0 0.0
        %968 = vmatpush.msra.mxu0 %v942
        %969 = vmatpush.msra.mxu0 %v938
        %970 = vmatpush.msra.mxu0 %v934
        %971 = vmatpush.msra.mxu0 %v930
        %972 = vmatmul.f32.gmra.mxu0 %v954
        %v973 = vpop.f32.mrf.mxu0
        %v974 = vadd.f32 %v951, %v973
        %975 = vdwg.mxu0
        %976 = vmatpush.msra.mxu0 0.0
        %977 = vmatpush.msra.mxu0 0.0
        %978 = vmatpush.msra.mxu0 0.0
        %979 = vmatpush.msra.mxu0 0.0
        %980 = vmatpush.msra.mxu0 0.0
        %981 = vmatpush.msra.mxu0 0.0
        %982 = vmatpush.msra.mxu0 0.0
        %983 = vmatpush.msra.mxu0 0.0
        %984 = vmatpush.msra.mxu0 0.0
        %985 = vmatpush.msra.mxu0 0.0
        %986 = vmatpush.msra.mxu0 0.0
        %987 = vmatpush.msra.mxu0 0.0
        %988 = vmatpush.msra.mxu0 %v943
        %989 = vmatpush.msra.mxu0 %v939
        %990 = vmatpush.msra.mxu0 %v935
        %991 = vmatpush.msra.mxu0 %v931
        %992 = vmatmul.f32.gmra.mxu0 %v954
        %v993 = vpop.f32.mrf.mxu0
        %v994 = vadd.f32 %v951, %v993
        %995 = vdwg.mxu0
        %996 = vmatpush.msra.mxu0 0.0
        %997 = vmatpush.msra.mxu0 0.0
        %998 = vmatpush.msra.mxu0 0.0
        %999 = vmatpush.msra.mxu0 0.0
        %1000 = vmatpush.msra.mxu0 0.0
        %1001 = vmatpush.msra.mxu0 0.0
        %1002 = vmatpush.msra.mxu0 0.0
        %1003 = vmatpush.msra.mxu0 0.0
        %1004 = vmatpush.msra.mxu0 0.0
        %1005 = vmatpush.msra.mxu0 0.0
        %1006 = vmatpush.msra.mxu0 0.0
        %1007 = vmatpush.msra.mxu0 0.0
        %1008 = vmatpush.msra.mxu0 %v944
        %1009 = vmatpush.msra.mxu0 %v940
        %1010 = vmatpush.msra.mxu0 %v936
        %1011 = vmatpush.msra.mxu0 %v932
        %1012 = vmatmul.f32.gmra.mxu0 %v954
        %v1013 = vpop.f32.mrf.mxu0
        %v1014 = vadd.f32 %v951, %v1013
        %1015 = vdwg.mxu0
        %1016 = vmatpush.msra.mxu0 0.0
        %1017 = vmatpush.msra.mxu0 0.0
        %1018 = vmatpush.msra.mxu0 0.0
        %1019 = vmatpush.msra.mxu0 0.0
        %1020 = vmatpush.msra.mxu0 0.0
        %1021 = vmatpush.msra.mxu0 0.0
        %1022 = vmatpush.msra.mxu0 0.0
        %1023 = vmatpush.msra.mxu0 0.0
        %1024 = vmatpush.msra.mxu0 0.0
        %1025 = vmatpush.msra.mxu0 0.0
        %1026 = vmatpush.msra.mxu0 0.0
        %1027 = vmatpush.msra.mxu0 0.0
        %1028 = vmatpush.msra.mxu0 %v945
        %1029 = vmatpush.msra.mxu0 %v941
        %1030 = vmatpush.msra.mxu0 %v937
        %1031 = vmatpush.msra.mxu0 %v933
        %1032 = vmatmul.f32.gmra.mxu0 %v954
        %v1033 = vpop.f32.mrf.mxu0
        %v1034 = vadd.f32 %v951, %v1033
        %1035 = vdwg.mxu0
        %v1040 = vrot.slane %v994, 7
        %v1041 = vrot.slane %v1014, 6
        %v1042 = vrot.slane %v1034, 5
        %vm1043 = vcmask 1040384
        %v1044 = vsel %vm1043, %v974, %v1040
        %vm1045 = vcmask 1042434
        %v1046 = vsel %vm1045, %v1041, %v1042
        %vm1047 = vcmask 1041408
        %v1048 = vsel %vm1047, %v1044, %v1046
        %v1050 = vlaneseq
        %vm1051 = vcmp.ge.s32.totalorder %v1050, 0
        %vm1052 = vcmp.lt.s32.totalorder %v1050, 512
        %vm1053 = vmand %vm1051, %vm1052
        %1054 = vst.msk [vmem:[%s164] sm:$0xf] %vm1053, %v1048
        %s1055 = sand.u32 %s93, 1
        %s1056 = scalar_lea.sflag [#allocation3], %s1055
        %s1057 = sand.u32 %s93, 1
        %s1058 = smul.addr %s1057, 4
        %s1059 = scalar_lea.vmem [#allocation2], %s1058
        // Predicated region
        $region33: #{tpu_custom_call.1} parent=31 // pred_check
          %p1060 = pneg %p103
        $region34: #{tpu_custom_call.1} parent=31 // pred_check_branch
          %1062 = sbr.rel (%p1060) target = $region36
        $region35: #{tpu_custom_call.1} parent=31 // pred_region
          %s1063 = smul.u32 4, %s17
          %1065 = vsyncadd %s1056, 0
          %s1066 = scalar_lea.hbm %s3, %s1063
          %s1068 = sshll.u32 %s1059, 4
          %s1069 = int_to_ptr.vmem [resolvable:$true] %s1068
          %s1070 = sshll.u32 %s1066, 4
          %s1071 = int_to_ptr.hbm [resolvable:$true] %s1070
          %1073 = dma.vmem_to_hbm [thread:$0]  %s1069, 64, %s1071, %s1056
        $region36: #{tpu_custom_call.1} parent=31 // pred_fallthru
          _
      $region32: #{tpu_custom_call.1} parent=5 // pred_fallthru
        _
      %p1074 = scmp.le.s32.totalorder 2, %s12
      // Predicated region
      $region37: #{tpu_custom_call.1} parent=5 // pred_check
        %p1075 = pneg %p1074
      $region38: #{tpu_custom_call.1} parent=5 // pred_check_branch
        %1077 = sbr.rel (%p1075) target = $region40
      $region39: #{tpu_custom_call.1} parent=5 // pred_region
        %s1078 = ssub.s32 %s12, 2
        // Predicated region
        $region41: #{tpu_custom_call.1} parent=39 // pred_check
          %p1079 = pneg %p109
        $region42: #{tpu_custom_call.1} parent=39 // pred_check_branch
          %1081 = sbr.rel (%p1079) target = $region44
        $region43: #{tpu_custom_call.1} parent=39 // pred_region
          %s1082 = sand.u32 %s94, 1
          %s1083 = scalar_lea.sflag [#allocation3], %s1082
          %s1084 = sand.u32 %s94, 1
          %s1085 = smul.addr %s1084, 4
          %s1086 = scalar_lea.vmem [#allocation2], %s1085
          %1088 = dma.done %s1083, 64
        $region44: #{tpu_custom_call.1} parent=39 // pred_fallthru
          _
      $region40: #{tpu_custom_call.1} parent=5 // pred_fallthru
        _
    $region6: #{tpu_custom_call.1} parent=1 // loop_footer
      %s16 = sadd.s32 1, %s12
    $region7: #{tpu_custom_call.1} parent=1 // loop_footer_branch
      %11 = sbr.rel target = $region3
    $region8: #{tpu_custom_call.1} parent=1 // loop_exit
      _
    %1089 = vsyncpa [#allocation3], 1
    %s1090 = scalar_lea.sflag [#allocation3], 1
    %1091 = vsyncpa %s1090, 1

</llo_original>
